<compile_context>
chip_gen: v7x
topology: tpu7x:2x2x1
jax: 0.10.0
libtpu: 0.0.40
codegen_flags: <defaults>
</compile_context>

<pallas_src>
import functools
import math

import jax
import jax.numpy as jnp
import numpy as np
from jax.experimental import pallas as pl
from jax.experimental.pallas import tpu as pltpu

EPS = 1e-6       # module EPS
BN_EPS = 1e-5    # torch.nn.BatchNorm1d default eps
NEG = 0.2        # negative_slope


# ----------------------------- small utilities -------------------------------
def _round_up(x, m):
    return (x + m - 1) // m * m


def _vmem_capacity_bytes():
    try:
        return int(pltpu.get_tpu_info().vmem_capacity_bytes)
    except Exception:
        return 64 * 1024 * 1024      # conservative: v7x per-TC VMEM


def _choose_lane_tile(n, per_lane_bytes, budget_bytes):
    """Lane tile TN and padded length Np (multiple of TN).  TN is either the
    full N (always a legal block) or a multiple of 128 sized to the budget."""
    cap = (budget_bytes // max(per_lane_bytes, 1)) // 128 * 128
    cap = max(128, min(2048, cap))
    if n <= cap:
        return n, n
    n_tiles = math.ceil(n / cap)
    tn = math.ceil(n / (n_tiles * 128)) * 128
    return tn, tn * n_tiles


# ----------------------------- in-kernel helpers -----------------------------
def _roll_rows(x, s):
    """out[r] = x[(r - s) mod R] (jnp.roll semantics), static shift, sublane axis."""
    r = x.shape[0]
    s = s % r
    if s == 0:
        return x
    return jnp.concatenate([x[r - s:, :], x[:r - s, :]], axis=0)


def _masked_moments(norm, lane_valid):
    """Per-tile masked (sum, sum of squared deviations from the tile mean).

    Welford-style per-tile moments keep the wrapper combine numerically stable.
    """
    m = lane_valid.astype(norm.dtype)                      # [1, TN]
    cnt = jnp.maximum(jnp.sum(m), 1.0)
    nm = norm * m
    s = jnp.sum(nm, axis=1, keepdims=True)                 # [Cp, 1]
    mu = s / cnt
    dev = (norm - mu) * m
    m2 = jnp.sum(dev * dev, axis=1, keepdims=True)         # [Cp, 1]
    return jnp.concatenate([s, m2], axis=0)                # [2*Cp, 1]


def _vec_norm3(p, c):
    """Vector norm over the 3 components of a component-major [3*c, TN] slab."""
    return jnp.sqrt(p[:c] * p[:c] + p[c:2 * c] * p[c:2 * c]
                    + p[2 * c:] * p[2 * c:]) + EPS


def _apply_vn_layer(xin, w_full, mean, istd):
    """One VNLinearLeakyReLU layer: fused [wf; wd] block matmul + BatchNorm with
    precomputed global stats + VN-LeakyReLU.

    xin:    [3*C_in', TN] activation (layout matching w_full's columns)
    w_full: [6*c_out, 3*C_in'] fused block weight
    mean/istd: [c_out, 1]
    returns [3*c_out, TN] component-major activation (rows v*c_out + c).
    """
    cop = mean.shape[0]
    pd = jnp.dot(w_full, xin, preferred_element_type=jnp.float32)   # [6*cop, TN]
    p = [pd[v * 2 * cop: v * 2 * cop + cop] for v in range(3)]
    d = [pd[v * 2 * cop + cop: (v + 1) * 2 * cop] for v in range(3)]
    norm = jnp.sqrt(p[0] * p[0] + p[1] * p[1] + p[2] * p[2]) + EPS
    # TODO(synk): pl.reciprocal(..., approx=True) rides the idle EUP slot but its
    # ~2^-8 relative error breaks the 1e-4 self-check; kept as exact divides.
    scale = (norm - mean) * istd / norm
    p = [pv * scale for pv in p]
    dotp = p[0] * d[0] + p[1] * d[1] + p[2] * d[2]
    dsq = d[0] * d[0] + d[1] * d[1] + d[2] * d[2]
    fac = (1.0 - NEG) * jnp.where(dotp >= 0, 0.0, dotp / (dsq + EPS))
    return jnp.concatenate([p[v] - fac * d[v] for v in range(3)], axis=0)


# --------------------------------- kernels -----------------------------------
def _stats1_kernel(x_ref, w1f_ref, out_ref, *, n_valid):
    """Pass 1: per-tile BN moments of ||wf1 x|| (feat-only fused matmul)."""
    xf = x_ref[0]                                                    # [3C, TN]
    tn = xf.shape[1]
    p = jnp.dot(w1f_ref[...], xf, preferred_element_type=jnp.float32)
    norm = _vec_norm3(p, w1f_ref.shape[0] // 3)
    lane = pl.program_id(1) * tn + jax.lax.broadcasted_iota(jnp.int32, (1, tn), 1)
    out_ref[0, 0] = _masked_moments(norm, lane < n_valid)


def _stats2_kernel(x_ref, w1_ref, m1_ref, s1_ref, w2f_ref, out_ref, *, n_valid):
    """Pass 2: apply layer 1, per-tile BN moments of ||wf2 q1||."""
    xf = x_ref[0]
    tn = xf.shape[1]
    q1 = _apply_vn_layer(xf, w1_ref[...], m1_ref[...], s1_ref[...])
    p = jnp.dot(w2f_ref[...], q1, preferred_element_type=jnp.float32)
    norm = _vec_norm3(p, w2f_ref.shape[0] // 3)
    lane = pl.program_id(1) * tn + jax.lax.broadcasted_iota(jnp.int32, (1, tn), 1)
    out_ref[0, 0] = _masked_moments(norm, lane < n_valid)


def _final_kernel(x_ref, w1_ref, m1_ref, s1_ref, w2_ref, m2_ref, s2_ref,
                  wl_ref, xstd_ref, z_ref):
    """Pass 3: apply both layers, frame projection, x_std in NATIVE layout."""
    xf = x_ref[0]                                                    # [3C, TN]
    c3 = xf.shape[0]
    q1 = _apply_vn_layer(xf, w1_ref[...], m1_ref[...], s1_ref[...])
    q2 = _apply_vn_layer(q1, w2_ref[...], m2_ref[...], s2_ref[...])
    z = jnp.dot(wl_ref[...], q2, preferred_element_type=jnp.float32)  # [9, TN], row v*3+k
    z_ref[0] = z
    # x_std in the native interleaved layout (row c*3 + k):
    #   out[c*3+k] = sum_v xf[c*3+v] * z[v*3+k]
    # Row mixing within each group of 3 is done with 4 sublane rolls + residue
    # masks; wrap-around rows never share the kept residue, so they are masked.
    rolled = {s: _roll_rows(xf, s) for s in (-2, -1, 0, 1, 2)}
    ridx = jax.lax.broadcasted_iota(jnp.int32, (c3, 1), 0) % 3
    acc = jnp.zeros_like(xf)
    for k in range(3):
        t = rolled[k - 0] * z[k:k + 1, :]
        t = t + rolled[k - 1] * z[3 + k:3 + k + 1, :]
        t = t + rolled[k - 2] * z[6 + k:6 + k + 1, :]
        acc = acc + jnp.where(ridx == k, t, 0.0)
    xstd_ref[0] = acc


# --------------------------------- wrapper ------------------------------------
def _finalize_stats(stats, counts, total):
    """Combine per-tile (sum, M2) moments -> (mean, 1/sqrt(var + eps)), [Cp, 1]."""
    cp = stats.shape[2] // 2
    s = stats[:, :, :cp, 0]                         # [B, T, Cp]
    m2 = stats[:, :, cp:, 0]
    cnt = counts[None, :, None]
    mean = jnp.sum(s, axis=(0, 1)) / total          # [Cp]
    mean_t = s / jnp.maximum(cnt, 1.0)
    m2_tot = jnp.sum(m2 + cnt * (mean_t - mean) ** 2, axis=(0, 1))
    var = m2_tot / total                            # biased (train-mode) variance
    return mean.reshape(-1, 1), (1.0 / jnp.sqrt(var + BN_EPS)).reshape(-1, 1)


def _fused_weights(wf1, wd1, wf2, wd2, wlin, C, C1p, C2p):
    """Build block-diagonal fused weights (channel-padded to multiples of 8).

    Layer 1 consumes x in its NATIVE interleaved layout (input row = c*3 + v):
    the de-interleave is folded into the column placement (v::3).  Layer 2 and
    the frame projection consume component-major activations (row = v*Cp + c).
    """
    f32 = jnp.float32
    C1, C2 = wf1.shape[0], wf2.shape[0]
    wf1p = jnp.pad(wf1.astype(f32), ((0, C1p - C1), (0, 0)))
    wd1p = jnp.pad(wd1.astype(f32), ((0, C1p - C1), (0, 0)))
    wf2p = jnp.pad(wf2.astype(f32), ((0, C2p - C2), (0, C1p - C1)))
    wd2p = jnp.pad(wd2.astype(f32), ((0, C2p - C2), (0, C1p - C1)))
    wlinp = jnp.pad(wlin.astype(f32), ((0, 0), (0, C2p - C2)))

    w1_feat = jnp.zeros((3 * C1p, 3 * C), f32)
    w1_full = jnp.zeros((6 * C1p, 3 * C), f32)
    w2_feat = jnp.zeros((3 * C2p, 3 * C1p), f32)
    w2_full = jnp.zeros((6 * C2p, 3 * C1p), f32)
    w_lin = jnp.zeros((9, 3 * C2p), f32)
    for v in range(3):
        w1_feat = w1_feat.at[v * C1p:(v + 1) * C1p, v::3].set(wf1p)
        w1_full = w1_full.at[v * 2 * C1p:v * 2 * C1p + C1p, v::3].set(wf1p)
        w1_full = w1_full.at[v * 2 * C1p + C1p:(v + 1) * 2 * C1p, v::3].set(wd1p)
        w2_feat = w2_feat.at[v * C2p:(v + 1) * C2p, v * C1p:(v + 1) * C1p].set(wf2p)
        w2_full = w2_full.at[v * 2 * C2p:v * 2 * C2p + C2p, v * C1p:(v + 1) * C1p].set(wf2p)
        w2_full = w2_full.at[v * 2 * C2p + C2p:(v + 1) * 2 * C2p,
                             v * C1p:(v + 1) * C1p].set(wd2p)
        w_lin = w_lin.at[v * 3:(v + 1) * 3, v * C2p:(v + 1) * C2p].set(wlinp)
    return w1_feat, w1_full, w2_feat, w2_full, w_lin


def vn_std_feature(x, wf1, wd1, wf2, wd2, wlin):
    """x: [B, C, 3, N] float32 -> (x_std [B, C, 3, N], z0 [B, 3, 3, N])."""
    B, C, V, N = x.shape
    assert V == 3
    C1, C2 = wf1.shape[0], wf2.shape[0]
    C1p, C2p = _round_up(C1, 8), _round_up(C2, 8)
    f32 = jnp.float32
    x = x.astype(f32)

    w1_feat, w1_full, w2_feat, w2_full, w_lin = _fused_weights(
        wf1, wd1, wf2, wd2, wlin, C, C1p, C2p)

    # ---- generation-aware VMEM / lane-tile budgets ----
    vmem_cap = _vmem_capacity_bytes()
    vmem_limit = int(min(0.72 * vmem_cap, 96 * 1024 * 1024))
    tile_budget = int(vmem_limit * 0.55)
    per_lane_final = 4 * (36 * C + 28 * (C1p + C2p) + 96)
    per_lane_stats = 4 * (12 * C + 24 * C1p + 10 * C2p + 64)
    tn_f, n_pad = _choose_lane_tile(N, per_lane_final, tile_budget)
    nt_f = n_pad // tn_f
    # stats passes have a smaller footprint -> take larger lane tiles
    tn_s = tn_f
    for m in range(nt_f, 0, -1):
        if nt_f % m == 0 and tn_f * m * per_lane_stats <= tile_budget and tn_f * m <= 4096:
            tn_s = tn_f * m
            break
    nt_s = n_pad // tn_s

    # Native layout view (free reshape); pad the lane axis only when needed.
    xflat = x.reshape(B, C * 3, N)
    if n_pad != N:
        xflat = jnp.pad(xflat, ((0, 0), (0, 0), (0, n_pad - N)))

    def wspec(a):
        zeros = (0,) * a.ndim
        return pl.BlockSpec(a.shape, lambda b, i: zeros)

    def x_spec(tn):
        return pl.BlockSpec((1, 3 * C, tn), lambda b, i: (b, 0, i))

    def stats_spec(cp):
        return pl.BlockSpec((1, 1, 2 * cp, 1), lambda b, i: (b, i, 0, 0))

    params = pltpu.CompilerParams(dimension_semantics=("parallel", "parallel"),
                                  vmem_limit_bytes=vmem_limit)

    counts = jnp.clip(N - jnp.arange(nt_s) * tn_s, 0, tn_s).astype(f32)
    total = float(B * N)

    # ---- pass 1: BN statistics for layer 1 ----
    mm1 = 2 * (3 * C1p) * (3 * C) * n_pad * B
    stats1 = pl.pallas_call(
        functools.partial(_stats1_kernel, n_valid=N),
        grid=(B, nt_s),
        in_specs=[x_spec(tn_s), wspec(w1_feat)],
        out_specs=stats_spec(C1p),
        out_shape=jax.ShapeDtypeStruct((B, nt_s, 2 * C1p, 1), f32),
        compiler_params=params,
        cost_estimate=pl.CostEstimate(
            flops=mm1 + 10 * C1p * n_pad * B, transcendentals=C1p * n_pad * B,
            bytes_accessed=4 * (3 * C * n_pad * B + w1_feat.size
                                + B * nt_s * 2 * C1p)),
    )(xflat, w1_feat)
    mean1, istd1 = _finalize_stats(stats1, counts, total)

    # ---- pass 2: apply layer 1, BN statistics for layer 2 ----
    mm2 = (2 * (6 * C1p) * (3 * C) + 2 * (3 * C2p) * (3 * C1p)) * n_pad * B
    stats2 = pl.pallas_call(
        functools.partial(_stats2_kernel, n_valid=N),
        grid=(B, nt_s),
        in_specs=[x_spec(tn_s), wspec(w1_full), wspec(mean1), wspec(istd1),
                  wspec(w2_feat)],
        out_specs=stats_spec(C2p),
        out_shape=jax.ShapeDtypeStruct((B, nt_s, 2 * C2p, 1), f32),
        compiler_params=params,
        cost_estimate=pl.CostEstimate(
            flops=mm2 + 40 * (C1p + C2p) * n_pad * B,
            transcendentals=(C1p + C2p) * n_pad * B,
            bytes_accessed=4 * (3 * C * n_pad * B + w1_full.size + w2_feat.size
                                + B * nt_s * 2 * C2p)),
    )(xflat, w1_full, mean1, istd1, w2_feat)
    mean2, istd2 = _finalize_stats(stats2, counts, total)

    # ---- pass 3: apply both layers, frame projection, native-layout outputs ----
    mm3 = (2 * (6 * C1p) * (3 * C) + 2 * (6 * C2p) * (3 * C1p)
           + 2 * 9 * (3 * C2p)) * n_pad * B
    xstd_flat, z_flat = pl.pallas_call(
        _final_kernel,
        grid=(B, nt_f),
        in_specs=[x_spec(tn_f), wspec(w1_full), wspec(mean1), wspec(istd1),
                  wspec(w2_full), wspec(mean2), wspec(istd2), wspec(w_lin)],
        out_specs=(pl.BlockSpec((1, 3 * C, tn_f), lambda b, i: (b, 0, i)),
                   pl.BlockSpec((1, 9, tn_f), lambda b, i: (b, 0, i))),
        out_shape=(jax.ShapeDtypeStruct((B, 3 * C, n_pad), f32),
                   jax.ShapeDtypeStruct((B, 9, n_pad), f32)),
        compiler_params=params,
        cost_estimate=pl.CostEstimate(
            flops=mm3 + (40 * (C1p + C2p) + 25 * 3 * C) * n_pad * B,
            transcendentals=(C1p + C2p) * n_pad * B,
            bytes_accessed=4 * ((2 * 3 * C + 9) * n_pad * B + w1_full.size
                                + w2_full.size + w_lin.size)),
    )(xflat, w1_full, mean1, istd1, w2_full, mean2, istd2, w_lin)

    # Free reshapes back to the PyTorch conventions (no wrapper-side transposes).
    x_std = xstd_flat.reshape(B, C, 3, n_pad)
    z0 = z_flat.reshape(B, 3, 3, n_pad)
    if n_pad != N:
        x_std = x_std[..., :N]
        z0 = z0[..., :N]
    return x_std, z0


# ---------------- pure-JAX reference (same semantics) ----------------
def _vn_layer_ref(x, wf, wd):
    p = jnp.einsum('oc,bcvn->bovn', wf, x)
    norm = jnp.sqrt(jnp.sum(p * p, axis=2)) + EPS                 # [B, O, N]
    mean = jnp.mean(norm, axis=(0, 2), keepdims=True)
    var = jnp.mean((norm - mean) ** 2, axis=(0, 2), keepdims=True)
    norm_bn = (norm - mean) / jnp.sqrt(var + BN_EPS)
    p = p / norm[:, :, None, :] * norm_bn[:, :, None, :]
    d = jnp.einsum('oc,bcvn->bovn', wd, x)
    dot = jnp.sum(p * d, axis=2, keepdims=True)
    mask = (dot >= 0).astype(jnp.float32)
    dsq = jnp.sum(d * d, axis=2, keepdims=True)
    return NEG * p + (1.0 - NEG) * (mask * p + (1.0 - mask) * (p - dot / (dsq + EPS) * d))


def vn_std_feature_ref(x, wf1, wd1, wf2, wd2, wlin):
    z = _vn_layer_ref(x, wf1, wd1)
    z = _vn_layer_ref(z, wf2, wd2)
    z0 = jnp.einsum('kc,bcvn->bkvn', wlin, z)
    z0 = jnp.transpose(z0, (0, 2, 1, 3))                          # [B, v, k, N]
    x_std = jnp.einsum('bivn,bvkn->bikn', x, z0)                  # 'bijm,bjkm->bikm'
    return x_std, z0


if __name__ == "__main__":
    B, C, N = 2, 8, 16     # batch, in_channels, n_samples
    key = jax.random.PRNGKey(0)
    ks = jax.random.split(key, 6)

    x = jax.random.normal(ks[0], (B, C, 3, N), dtype=jnp.float32)
    # deterministic synthetic weights (Linear(..., bias=False) shapes)
    wf1 = jax.random.normal(ks[1], (C // 2, C), dtype=jnp.float32) / np.sqrt(C)
    wd1 = jax.random.normal(ks[2], (C // 2, C), dtype=jnp.float32) / np.sqrt(C)
    wf2 = jax.random.normal(ks[3], (C // 4, C // 2), dtype=jnp.float32) / np.sqrt(C // 2)
    wd2 = jax.random.normal(ks[4], (C // 4, C // 2), dtype=jnp.float32) / np.sqrt(C // 2)
    wlin = jax.random.normal(ks[5], (3, C // 4), dtype=jnp.float32) / np.sqrt(C // 4)

    x_std, z0 = vn_std_feature(x, wf1, wd1, wf2, wd2, wlin)
    jax.block_until_ready((x_std, z0))

    assert x_std.shape == (B, C, 3, N)
    assert z0.shape == (B, 3, 3, N)

    x_std_ref, z0_ref = vn_std_feature_ref(x, wf1, wd1, wf2, wd2, wlin)
    np.testing.assert_allclose(np.asarray(z0), np.asarray(z0_ref), rtol=1e-4, atol=1e-4)
    np.testing.assert_allclose(np.asarray(x_std), np.asarray(x_std_ref), rtol=1e-4, atol=1e-4)

    print("KERNEL_OK")
</pallas_src>

<mosaic_0001>
module attributes {stable_mosaic.version = 11 : i64} {
  func.func @_stats1_kernel(%arg0: i32, %arg1: i32, %arg2: memref<1x24x16xf32, #tpu.memory_space<vmem>>, %arg3: memref<24x24xf32, #tpu.memory_space<vmem>>, %arg4: memref<1x1x16x1xf32, #tpu.memory_space<vmem>>) attributes {dimension_semantics = [#tpu.dimension_semantics<parallel>, #tpu.dimension_semantics<parallel>], iteration_bounds = array<i64: 2, 1>, scalar_prefetch = 0 : i64, scratch_operands = 0 : i64, tpu.core_type = #tpu.core_type<tc>, window_params = [{transform_indices = @transform_0, window_bounds = array<i64: 1, 24, 16>}, {pipeline_mode = #tpu.pipeline_mode<synchronous>, transform_indices = @transform_1, window_bounds = array<i64: 24, 24>}, {transform_indices = @transform_2, window_bounds = array<i64: 1, 1, 16, 1>}]} {
    %c0 = arith.constant 0 : index
    %c0_0 = arith.constant 0 : index
    %c0_1 = arith.constant 0 : index
    %0 = vector.load %arg2[%c0, %c0_0, %c0_1] : memref<1x24x16xf32, #tpu.memory_space<vmem>>, vector<1x24x16xf32>
    %1 = vector.shape_cast %0 : vector<1x24x16xf32> to vector<24x16xf32>
    %c0_2 = arith.constant 0 : index
    %c0_3 = arith.constant 0 : index
    %2 = vector.load %arg3[%c0_2, %c0_3] : memref<24x24xf32, #tpu.memory_space<vmem>>, vector<24x24xf32>
    %cst = arith.constant dense<0.000000e+00> : vector<24x16xf32>
    %3 = tpu.matmul %2, %1, %cst {dimension_numbers = #tpu.dot_dimension_numbers<[1], [0], [0], [1], [0, 0, 1, 1], [], []>} : vector<24x24xf32>, vector<24x16xf32>, vector<24x16xf32> -> vector<24x16xf32>
    %4 = vector.extract_strided_slice %3 {offsets = [0, 0], sizes = [8, 16], strides = [1, 1]} : vector<24x16xf32> to vector<8x16xf32>
    %5 = vector.extract_strided_slice %3 {offsets = [0, 0], sizes = [8, 16], strides = [1, 1]} : vector<24x16xf32> to vector<8x16xf32>
    %6 = arith.mulf %4, %5 : vector<8x16xf32>
    %7 = vector.extract_strided_slice %3 {offsets = [8, 0], sizes = [8, 16], strides = [1, 1]} : vector<24x16xf32> to vector<8x16xf32>
    %8 = vector.extract_strided_slice %3 {offsets = [8, 0], sizes = [8, 16], strides = [1, 1]} : vector<24x16xf32> to vector<8x16xf32>
    %9 = arith.mulf %7, %8 : vector<8x16xf32>
    %10 = arith.addf %6, %9 : vector<8x16xf32>
    %11 = vector.extract_strided_slice %3 {offsets = [16, 0], sizes = [8, 16], strides = [1, 1]} : vector<24x16xf32> to vector<8x16xf32>
    %12 = vector.extract_strided_slice %3 {offsets = [16, 0], sizes = [8, 16], strides = [1, 1]} : vector<24x16xf32> to vector<8x16xf32>
    %13 = arith.mulf %11, %12 : vector<8x16xf32>
    %14 = arith.addf %10, %13 : vector<8x16xf32>
    %15 = math.sqrt %14 : vector<8x16xf32>
    %cst_4 = arith.constant 9.99999997E-7 : f32
    %16 = vector.broadcast %cst_4 : f32 to vector<8x16xf32>
    %17 = arith.addf %15, %16 : vector<8x16xf32>
    %c16_i32 = arith.constant 16 : i32
    %18 = arith.muli %arg1, %c16_i32 : i32
    %19 = tpu.iota {dimensions = array<i32: 1>} : vector<1x16xi32>
    %20 = vector.broadcast %18 : i32 to vector<1x16xi32>
    %21 = arith.addi %20, %19 : vector<1x16xi32>
    %c16_i32_5 = arith.constant 16 : i32
    %22 = vector.broadcast %c16_i32_5 : i32 to vector<1x16xi32>
    %23 = arith.cmpi slt, %21, %22 : vector<1x16xi32>
    %24 = arith.extui %23 : vector<1x16xi1> to vector<1x16xi32>
    %25 = arith.sitofp %24 : vector<1x16xi32> to vector<1x16xf32>
    %26 = vector.shape_cast %25 : vector<1x16xf32> to vector<1x1x16xf32>
    %cst_6 = arith.constant dense<0.000000e+00> : vector<1xf32>
    %27 = vector.multi_reduction <add>, %26, %cst_6 [1, 2] : vector<1x1x16xf32> to vector<1xf32>
    %28 = vector.shape_cast %27 : vector<1xf32> to vector<1x1x1xf32>
    %29 = vector.extract %28[0, 0, 0] : f32 from vector<1x1x1xf32>
    %cst_7 = arith.constant 1.000000e+00 : f32
    %30 = arith.maximumf %29, %cst_7 : f32
    %31 = vector.broadcast %25 : vector<1x16xf32> to vector<8x16xf32>
    %32 = arith.mulf %17, %31 : vector<8x16xf32>
    %cst_8 = arith.constant dense<0.000000e+00> : vector<8xf32>
    %33 = vector.multi_reduction <add>, %32, %cst_8 [1] : vector<8x16xf32> to vector<8xf32>
    %34 = vector.shape_cast %33 : vector<8xf32> to vector<8x1xf32>
    %35 = vector.broadcast %30 : f32 to vector<8x1xf32>
    %36 = arith.divf %34, %35 : vector<8x1xf32>
    %37 = vector.broadcast %36 : vector<8x1xf32> to vector<8x16xf32>
    %38 = arith.subf %17, %37 : vector<8x16xf32>
    %39 = vector.broadcast %25 : vector<1x16xf32> to vector<8x16xf32>
    %40 = arith.mulf %38, %39 : vector<8x16xf32>
    %41 = arith.mulf %40, %40 : vector<8x16xf32>
    %cst_9 = arith.constant dense<0.000000e+00> : vector<8xf32>
    %42 = vector.multi_reduction <add>, %41, %cst_9 [1] : vector<8x16xf32> to vector<8xf32>
    %43 = vector.shape_cast %42 : vector<8xf32> to vector<8x1xf32>
    %44 = tpu.concatenate %34, %43 in 0 : vector<8x1xf32>, vector<8x1xf32> -> vector<16x1xf32>
    %c0_10 = arith.constant 0 : index
    %c0_11 = arith.constant 0 : index
    %c0_12 = arith.constant 0 : index
    %c0_13 = arith.constant 0 : index
    %45 = vector.load %arg4[%c0_10, %c0_11, %c0_12, %c0_13] : memref<1x1x16x1xf32, #tpu.memory_space<vmem>>, vector<1x1x16x1xf32>
    %46 = vector.shape_cast %45 : vector<1x1x16x1xf32> to vector<16x1xf32>
    %47 = vector.shape_cast %44 : vector<16x1xf32> to vector<1x1x16x1xf32>
    tpu.vector_store %arg4[%c0_10, %c0_11, %c0_12, %c0_13], %47 {strides = array<i32>} : memref<1x1x16x1xf32, #tpu.memory_space<vmem>>, vector<1x1x16x1xf32>,
    return
  }
  func.func @transform_0(%arg0: i32, %arg1: i32) -> (i32, i32, i32) {
    %c0_i32 = arith.constant 0 : i32
    %c0_i32_0 = arith.constant 0 : i32
    return %arg0, %c0_i32, %arg1 : i32, i32, i32
  }
  func.func @transform_1(%arg0: i32, %arg1: i32) -> (i32, i32) {
    %c0_i32 = arith.constant 0 : i32
    %c0_i32_0 = arith.constant 0 : i32
    %c0_i32_1 = arith.constant 0 : i32
    return %c0_i32, %c0_i32_0 : i32, i32
  }
  func.func @transform_2(%arg0: i32, %arg1: i32) -> (i32, i32, i32, i32) {
    %c0_i32 = arith.constant 0 : i32
    %c0_i32_0 = arith.constant 0 : i32
    %c0_i32_1 = arith.constant 0 : i32
    return %arg0, %arg1, %c0_i32, %c0_i32_0 : i32, i32, i32, i32
  }
}

</mosaic_0001>

<llo_original>
// kernel: tpu_custom_call.1
$region0: #{tpu_custom_call.1}
  #allocation0 [shape = 'u32[]', space=smem, size = 0x4, offset = 0x4, fixed_abs, tag = 'smem constant byte address 0x4 - core index']
  #allocation1 [shape = 'u32[144,128]{1,0:T(1,128)}', space=vmem, size = 0x12000, scoped, tag = 'internal scratch']
  %s0 = inlined_call_operand.vmem [shape: f32[2,24,16], index: 0, kind: input, shape index: {}]
  %s1 = inlined_call_operand.vmem [shape: f32[24,24], index: 1, kind: input, shape index: {}]
  %s2 = inlined_call_operand.vmem [shape: f32[2,1,16,1], index: 2, kind: output, shape index: {}]
  %s3 = sld [smem:[#allocation0]]
  $region41: #{tpu_custom_call.1} parent=0
    _
  %s5 = ssub.s32 1, %s3
  %s6 = scalar_select 0, %s5, %s3
  loop: start=0, step=1, limit=4
  $region2: #{tpu_custom_call.1} parent=0 // loop_pre_header
    _
  $region3: #{tpu_custom_call.1} parent=0 // loop_header
    %s8 = sphi 0, %s12
    %p9 = scmp.ge.s32.totalorder %s8, 4
    %s15 = sphi 0, %s27
    %s16 = sphi 0, %s23
    %s17 = sphi 0, %s15
    %s18 = sphi 0, %s16
    %s19 = sphi 0, %s17
    %s20 = sphi 0, %s18
    %s32 = sphi 0, %s34
    %s35 = sphi 0, %s32
    %s36 = sphi 0, %s35
    %s52 = sphi 0, %s36
    %s56 = sphi 0, %s56
    %s58 = sphi 0, %s56
    %s59 = sphi 0, %s58
    %s73 = sphi 0, %s59
    %s81 = sphi 0, %s83
    %s84 = sphi 0, %s81
    %s85 = sphi 0, %s84
    %s101 = sphi 0, %s85
  $region4: #{tpu_custom_call.1} parent=0 // loop_header_branch
    %11 = sbr.rel (%p9) target = $region8
  $region5: #{tpu_custom_call.1} parent=0 // loop_body
    %s13 = ssub.s32 %s8, 1
    %s14 = ssub.s32 %s8, 2
    %s21 = sadd.s32 1, %s16
    %p22 = scmp.ge.s32.totalorder %s21, 1
    %s23 = scalar_select %p22, 0, %s21
    %s24 = sadd.s32 1, %s15
    %s25 = scalar_select %p22, %s24, %s15
    %p26 = scmp.ge.s32.totalorder %s25, 2
    %s27 = scalar_select %p26, 0, %s25
    %s28 = ssub.s32 %s15, %s27
    %s29 = ssub.s32 %s16, %s23
    %s30 = sor.u32 %s28, %s29
    %p31 = scmp.eq.s32.totalorder %s30, 0
    %s33 = sadd.s32 %s32, 1
    %s34 = scalar_select %p31, %s32, %s33
    %p37 = pneg %p31
    %p38 = scmp.eq.s32.totalorder %s8, 1
    %p39 = por %p37, %p38
    %p40 = scmp.ne.s32.totalorder %s32, %s35
    %p41 = scmp.eq.s32.totalorder %s8, 0
    %p42 = por %p40, %p41
    %p43 = scmp.ne.s32.totalorder %s32, %s35
    %p44 = scmp.eq.s32.totalorder %s13, 1
    %p45 = por %p43, %p44
    %p46 = scmp.ne.s32.totalorder %s35, %s36
    %p47 = scmp.eq.s32.totalorder %s13, 0
    %p48 = por %p46, %p47
    %p49 = scmp.ne.s32.totalorder %s35, %s36
    %p50 = scmp.eq.s32.totalorder %s14, 1
    %p51 = por %p49, %p50
    %p53 = scmp.ne.s32.totalorder %s36, %s52
    %p54 = scmp.eq.s32.totalorder %s14, 0
    %p55 = por %p53, %p54
    %s57 = sadd.s32 %s56, 1
    %p60 = scmp.eq.s32.totalorder %s8, 1
    %p61 = scmp.ne.s32.totalorder %s56, %s58
    %p62 = scmp.eq.s32.totalorder %s8, 0
    %p63 = por %p61, %p62
    %p64 = scmp.ne.s32.totalorder %s56, %s58
    %p65 = scmp.eq.s32.totalorder %s13, 1
    %p66 = por %p64, %p65
    %p67 = scmp.ne.s32.totalorder %s58, %s59
    %p68 = scmp.eq.s32.totalorder %s13, 0
    %p69 = por %p67, %p68
    %p70 = scmp.ne.s32.totalorder %s58, %s59
    %p71 = scmp.eq.s32.totalorder %s14, 1
    %p72 = por %p70, %p71
    %p74 = scmp.ne.s32.totalorder %s59, %s73
    %p75 = scmp.eq.s32.totalorder %s14, 0
    %p76 = por %p74, %p75
    %s77 = ssub.s32 %s15, %s27
    %s78 = ssub.s32 %s16, %s23
    %s79 = sor.u32 %s77, %s78
    %p80 = scmp.eq.s32.totalorder %s79, 0
    %s82 = sadd.s32 %s81, 1
    %s83 = scalar_select %p80, %s81, %s82
    %p86 = pneg %p80
    %p87 = scmp.eq.s32.totalorder %s8, 1
    %p88 = por %p86, %p87
    %p89 = scmp.ne.s32.totalorder %s81, %s84
    %p90 = scmp.eq.s32.totalorder %s8, 0
    %p91 = por %p89, %p90
    %p92 = scmp.ne.s32.totalorder %s81, %s84
    %p93 = scmp.eq.s32.totalorder %s13, 1
    %p94 = por %p92, %p93
    %p95 = scmp.ne.s32.totalorder %s84, %s85
    %p96 = scmp.eq.s32.totalorder %s13, 0
    %p97 = por %p95, %p96
    %p98 = scmp.ne.s32.totalorder %s84, %s85
    %p99 = scmp.eq.s32.totalorder %s14, 1
    %p100 = por %p98, %p99
    %p102 = scmp.ne.s32.totalorder %s85, %s101
    %p103 = scmp.eq.s32.totalorder %s14, 0
    %p104 = por %p102, %p103
    %p105 = scmp.le.s32.totalorder 1, %s8
    %p106 = scmp.lt.s32.totalorder %s8, 3
    %p107 = pnand %p105, %p106
    %p108 = pneg %p107
    // Predicated region
    $region9: #{tpu_custom_call.1} parent=5 // pred_check
      _
    $region10: #{tpu_custom_call.1} parent=5 // pred_check_branch
      %110 = sbr.rel (%p107) target = $region12
    $region11: #{tpu_custom_call.1} parent=5 // pred_region
      %s111 = ssub.s32 %s8, 1
      // Predicated region
      $region13: #{tpu_custom_call.1} parent=11 // pred_check
        %p112 = pneg %p69
      $region14: #{tpu_custom_call.1} parent=11 // pred_check_branch
        %114 = sbr.rel (%p112) target = $region16
      $region15: #{tpu_custom_call.1} parent=11 // pred_region
        _
      $region16: #{tpu_custom_call.1} parent=11 // pred_fallthru
        _
    $region12: #{tpu_custom_call.1} parent=5 // pred_fallthru
      _
    %p115 = scmp.lt.s32.totalorder %s8, 2
    // Predicated region
    $region17: #{tpu_custom_call.1} parent=5 // pred_check
      %p116 = pneg %p115
    $region18: #{tpu_custom_call.1} parent=5 // pred_check_branch
      %118 = sbr.rel (%p116) target = $region20
    $region19: #{tpu_custom_call.1} parent=5 // pred_region
      // Predicated region
      $region21: #{tpu_custom_call.1} parent=19 // pred_check
        %p119 = pneg %p42
      $region22: #{tpu_custom_call.1} parent=19 // pred_check_branch
        %121 = sbr.rel (%p119) target = $region24
      $region23: #{tpu_custom_call.1} parent=19 // pred_region
        %p122 = scmp.lt.s32.totalorder %s15, 1
        %s123 = scalar_select %p122, %s15, 1
        %p124 = scmp.lt.s32.totalorder %s16, 0
        %s125 = scalar_select %p124, %s16, 0
        %s126 = smul.addr %s123, 3
        %s127 = sadd.s32 %s125, %s126
        %s128 = smul.addr %s127, 8
        %s129 = scalar_lea.vmem %s0, %s128
      $region24: #{tpu_custom_call.1} parent=19 // pred_fallthru
        _
    $region20: #{tpu_custom_call.1} parent=5 // pred_fallthru
      _
    %p130 = scmp.le.s32.totalorder 1, %s8
    %p131 = scmp.lt.s32.totalorder %s8, 3
    %p132 = pnand %p130, %p131
    %p133 = pneg %p132
    // Predicated region
    $region25: #{tpu_custom_call.1} parent=5 // pred_check
      _
    $region26: #{tpu_custom_call.1} parent=5 // pred_check_branch
      %135 = sbr.rel (%p132) target = $region28
    $region27: #{tpu_custom_call.1} parent=5 // pred_region
      %s136 = ssub.s32 %s8, 1
      %p137 = scmp.lt.s32.totalorder %s17, 1
      %s138 = scalar_select %p137, %s17, 1
      %p139 = scmp.lt.s32.totalorder %s18, 0
      %s140 = scalar_select %p139, %s18, 0
      %s141 = smul.addr %s138, 3
      %s142 = sadd.s32 %s140, %s141
      %s143 = smul.addr %s142, 8
      %s144 = scalar_lea.vmem %s0, %s143
      %p145 = pneg %p48
      %p146 = pneg %p45
      %p147 = pneg %p69
      %p148 = pneg %p66
      %p149 = pneg %p97
      %p150 = pneg %p94
      %p151 = scmp.lt.s32.totalorder %s17, 1
      %s152 = scalar_select %p151, %s17, 1
      %p153 = scmp.lt.s32.totalorder %s18, 0
      %s154 = scalar_select %p153, %s18, 0
      %s155 = smul.addr %s154, 2
      %s156 = smul.addr %s152, 2
      %s157 = sadd.s32 %s155, %s156
      %s158 = smul.addr %s157, 8
      %s159 = scalar_lea.vmem %s2, %s158
      %p160 = scmp.lt.s32.totalorder %s17, 1
      %s161 = scalar_select %p160, %s17, 1
      %p162 = scmp.lt.s32.totalorder %s18, 0
      %s163 = scalar_select %p162, %s18, 0
      %s164 = smul.addr %s161, 3
      %s165 = sadd.s32 %s163, %s164
      %s166 = smul.addr %s165, 8
      %s167 = scalar_lea.vmem %s0, %s166
      %p168 = scmp.lt.s32.totalorder %s17, 1
      %s169 = scalar_select %p168, %s17, 1
      %p170 = scmp.lt.s32.totalorder %s18, 0
      %s171 = scalar_select %p170, %s18, 0
      %s172 = smul.addr %s171, 2
      %s173 = smul.addr %s169, 2
      %s174 = sadd.s32 %s172, %s173
      %s175 = smul.addr %s174, 8
      %s176 = scalar_lea.vmem %s2, %s175
      %v177 = vld [vmem:[%s167] sm:$0xff]
      %v178 = vld [vmem:[%s167 + $0x8] sm:$0xff]
      %v179 = vld [vmem:[%s167 + $0x10] sm:$0xff]
      %v180 = vld [vmem:[%s1] sm:$0xff]
      %v181 = vld [vmem:[%s1 + $0x8] sm:$0xff]
      %v182 = vld [vmem:[%s1 + $0x10] sm:$0xff]
      %vm183 = vcmask 195584
      %v185 = vsel %vm183, %v180, 0
      %v188 = vsel %vm183, %v181, 0
      %v191 = vsel %vm183, %v182, 0
      %193 = vmatprep.subr.mxu0 0.0
      %194 = vmatpush1.msra.mxu0 %v177
      %195 = vmatprep.subr.mxu0 0.0
      %196 = vmatpush1.msra.mxu0 %v178
      %197 = vmatprep.subr.mxu0 0.0
      %198 = vmatpush1.msra.mxu0 %v179
      %199 = vmatprep.subr.mxu0 0.0
      %200 = vmatpush1.msra.mxu0 0.0
      %201 = vmatprep.subr.mxu0 0.0
      %202 = vmatpush1.msra.mxu0 0.0
      %203 = vmatprep.subr.mxu0 0.0
      %204 = vmatpush1.msra.mxu0 0.0
      %205 = vmatprep.subr.mxu0 0.0
      %206 = vmatpush1.msra.mxu0 0.0
      %207 = vmatprep.subr.mxu0 0.0
      %208 = vmatpush1.msra.mxu0 0.0
      %209 = vmatprep.subr.mxu0 0.0
      %210 = vmatpush1.msra.mxu0 0.0
      %211 = vmatprep.subr.mxu0 0.0
      %212 = vmatpush1.msra.mxu0 0.0
      %213 = vmatprep.subr.mxu0 0.0
      %214 = vmatpush1.msra.mxu0 0.0
      %215 = vmatprep.subr.mxu0 0.0
      %216 = vmatpush1.msra.mxu0 0.0
      %217 = vmatprep.subr.mxu0 0.0
      %218 = vmatpush1.msra.mxu0 0.0
      %219 = vmatprep.subr.mxu0 0.0
      %220 = vmatpush1.msra.mxu0 0.0
      %221 = vmatprep.subr.mxu0 0.0
      %222 = vmatpush1.msra.mxu0 0.0
      %223 = vmatprep.subr.mxu0 0.0
      %224 = vmatpush1.msra.mxu0 0.0
      %225 = vmatprep.subr.mxu0 0.0
      %226 = vmatpush1.msra.mxu0 0.0
      %227 = vmatprep.subr.mxu0 0.0
      %228 = vmatpush1.msra.mxu0 0.0
      %229 = vmatprep.subr.mxu0 0.0
      %230 = vmatpush1.msra.mxu0 0.0
      %231 = vmatprep.subr.mxu0 0.0
      %232 = vmatpush1.msra.mxu0 0.0
      %233 = vmatprep.subr.mxu0 0.0
      %234 = vmatpush1.msra.mxu0 0.0
      %235 = vmatprep.subr.mxu0 0.0
      %236 = vmatpush1.msra.mxu0 0.0
      %237 = vmatprep.subr.mxu0 0.0
      %238 = vmatpush1.msra.mxu0 0.0
      %239 = vmatprep.subr.mxu0 0.0
      %240 = vmatpush1.msra.mxu0 0.0
      %241 = vmatprep.subr.mxu0 0.0
      %242 = vmatpush1.msra.mxu0 0.0
      %243 = vmatprep.subr.mxu0 0.0
      %244 = vmatpush1.msra.mxu0 0.0
      %245 = vmatprep.subr.mxu0 0.0
      %246 = vmatpush1.msra.mxu0 0.0
      %247 = vmatprep.subr.mxu0 0.0
      %248 = vmatpush1.msra.mxu0 0.0
      %249 = vmatprep.subr.mxu0 0.0
      %250 = vmatpush1.msra.mxu0 0.0
      %251 = vmatprep.subr.mxu0 0.0
      %252 = vmatpush1.msra.mxu0 0.0
      %253 = vmatprep.subr.mxu0 0.0
      %254 = vmatpush1.msra.mxu0 0.0
      %255 = vmatprep.subr.mxu0 0.0
      %256 = vmatpush1.msra.mxu0 0.0
      %257 = vmatprep.mubr.f32.mxu0 0.0
      %258 = vmatmul.mubr.f32.gmra.mrb[0].mxu0 %v185
      %v259 = vpop.f32.mrb[0].mxu0
      %v260 = vadd.f32 0.0, %v259
      %v261 = vpop.f32.mrb[0].mxu0
      %262 = vmatprep.mubr.f32.mxu0 0.0
      %263 = vmatmul.mubr.f32.gmra.mrb[0].mxu0 %v188
      %v264 = vpop.f32.mrb[0].mxu0
      %v265 = vadd.f32 0.0, %v264
      %v266 = vpop.f32.mrb[0].mxu0
      %267 = vmatprep.mubr.f32.mxu0 0.0
      %268 = vmatmul.mubr.f32.gmra.mrb[0].mxu0 %v191
      %v269 = vpop.f32.mrb[0].mxu0
      %v270 = vadd.f32 0.0, %v269
      %v271 = vpop.f32.mrb[0].mxu0
      %272 = vdwg.mxu0
      %v273 = vmul.f32 %v260, %v260
      %v274 = vmul.f32 %v265, %v265
      %v275 = vadd.f32 %v273, %v274
      %v276 = vmul.f32 %v270, %v270
      %v277 = vadd.f32 %v275, %v276
      %v278 = vrsqrt.pop %v277
      %v279 = vmul.f32 %v277, %v278
      %vm280 = vcmp.eq.f32.partialorder %v277, inf
      %v281 = vsel %vm280, %v277, %v279
      %vm282 = vcmp.eq.f32.partialorder %v277, 0.0
      %v283 = vand.u32 %v277, 2147483648
      %v284 = vsel %vm282, %v283, %v281
      %v285 = vadd.f32 %v284, 1e-06
      %s286 = smul.u32 %s18, 16
      %v287 = vlaneseq
      %v288 = vand.u32 %v287, 127
      %v289 = vstv %s286
      %v290 = vadd.s32 %v289, %v288
      %vm291 = vcmp.lt.s32.totalorder %v290, 16
      %v292 = vsel %vm291, 1, 0
      %v293 = vcvt.s32.f32 %v292
      %vm294 = vcmask 122880
      %v295 = vsel %vm294, %v293, 0.0
      %296 = vadd.xlane.f32.xlu0 %v295
      %v297 = vpop.xlane.xlu0 %296
      %v298 = vrot.slane %v297, 4
      %v299 = vadd.f32 %v297, %v298
      %v300 = vrot.slane %v299, 2
      %v301 = vadd.f32 %v299, %v300
      %v302 = vrot.slane %v301, 1
      %v303 = vadd.f32 %v301, %v302
      %s304 = vtos %v303
      %s305 = smax.f32 %s304, 1.0
      %v306 = vmul.f32 %v285, %v293
      %vm307 = vcmask 130048
      %v308 = vsel %vm307, %v306, 0.0
      %309 = vadd.xlane.f32.xlu0 %v308
      %v310 = vpop.xlane.xlu0 %309
      %v311 = vstv %s305
      %v312 = vrcp.pop %v311
      %v313 = vmul.f32 %v310, %v312
      %v314 = vsub.f32 %v285, %v313
      %v315 = vmul.f32 %v314, %v293
      %v316 = vmul.f32 %v315, %v315
      %v317 = vsel %vm307, %v316, 0.0
      %318 = vadd.xlane.f32.xlu0 %v317
      %v319 = vpop.xlane.xlu0 %318
      %vm320 = vcmask 7168
      %321 = vst.msk [vmem:[%s176] sm:$0xff] %vm320, %v310
      %322 = vst.msk [vmem:[%s176 + $0x8] sm:$0xff] %vm320, %v319
      %p323 = scmp.lt.s32.totalorder %s17, 1
      %s324 = scalar_select %p323, %s17, 1
      %p325 = scmp.lt.s32.totalorder %s18, 0
      %s326 = scalar_select %p325, %s18, 0
      %s327 = smul.addr %s326, 2
      %s328 = smul.addr %s324, 2
      %s329 = sadd.s32 %s327, %s328
      %s330 = smul.addr %s329, 8
      %s331 = scalar_lea.vmem %s2, %s330
      // Predicated region
      $region29: #{tpu_custom_call.1} parent=27 // pred_check
        %p332 = pneg %p94
      $region30: #{tpu_custom_call.1} parent=27 // pred_check_branch
        %334 = sbr.rel (%p332) target = $region32
      $region31: #{tpu_custom_call.1} parent=27 // pred_region
        _
      $region32: #{tpu_custom_call.1} parent=27 // pred_fallthru
        _
    $region28: #{tpu_custom_call.1} parent=5 // pred_fallthru
      _
    %p335 = scmp.le.s32.totalorder 2, %s8
    // Predicated region
    $region33: #{tpu_custom_call.1} parent=5 // pred_check
      %p336 = pneg %p335
    $region34: #{tpu_custom_call.1} parent=5 // pred_check_branch
      %338 = sbr.rel (%p336) target = $region36
    $region35: #{tpu_custom_call.1} parent=5 // pred_region
      %s339 = ssub.s32 %s8, 2
      // Predicated region
      $region37: #{tpu_custom_call.1} parent=35 // pred_check
        %p340 = pneg %p100
      $region38: #{tpu_custom_call.1} parent=35 // pred_check_branch
        %342 = sbr.rel (%p340) target = $region40
      $region39: #{tpu_custom_call.1} parent=35 // pred_region
        %p343 = scmp.lt.s32.totalorder %s19, 1
        %s344 = scalar_select %p343, %s19, 1
        %p345 = scmp.lt.s32.totalorder %s20, 0
        %s346 = scalar_select %p345, %s20, 0
        %s347 = smul.addr %s346, 2
        %s348 = smul.addr %s344, 2
        %s349 = sadd.s32 %s347, %s348
        %s350 = smul.addr %s349, 8
        %s351 = scalar_lea.vmem %s2, %s350
      $region40: #{tpu_custom_call.1} parent=35 // pred_fallthru
        _
    $region36: #{tpu_custom_call.1} parent=5 // pred_fallthru
      _
  $region6: #{tpu_custom_call.1} parent=0 // loop_footer
    %s12 = sadd.s32 1, %s8
  $region7: #{tpu_custom_call.1} parent=0 // loop_footer_branch
    %7 = sbr.rel target = $region3
  $region8: #{tpu_custom_call.1} parent=0 // loop_exit
    _

</llo_original>
